<compile_context>
chip_gen: v5e
topology: v5e:2x2
jax: 0.10.0
libtpu: 0.0.40
codegen_flags: <defaults>
</compile_context>

<pallas_src>
import functools

import jax
import jax.numpy as jnp
from jax import lax
from jax.experimental import pallas as pl
from jax.experimental.pallas import tpu as pltpu


def _round_up(x, m):
    return ((x + m - 1) // m) * m


def _physical_vmem_bytes():
    try:
        return int(pltpu.get_tpu_info().vmem_capacity_bytes)
    except Exception:
        return 64 << 20  # conservative fallback (v7x per-core VMEM)


# ----------------------------------------------------------------------------
# Kernel 1: fused conv (single matmul, contraction = K*K*Cin) + bias, plus
#           per-(image, band) per-channel sum / sum-of-squares for BatchNorm.
# Grid: (N, num_row_bands), both parallel.
# ----------------------------------------------------------------------------
def conv_stats_kernel(x_ref, w_ref, b_ref, y_ref, sum_ref, ssq_ref, *,
                      wp, w_valid, rows, rt):
    # x_ref  : (1, K*K*Cin, rt)   bf16  pre-gathered patches (channels-on-sublanes)
    # w_ref  : (Cout_p, K*K*Cin)  bf16  flattened weights (grid-invariant)
    # b_ref  : (Cout_p, 1)        f32   conv bias (grid-invariant)
    # y_ref  : (1, Cout_p, rt)    bf16  conv + bias output (pre-BN)
    # sum_ref: (1, 1, Cout_p, 1)  f32   per-(image,band) channel sum (valid rows)
    # ssq_ref: (1, 1, Cout_p, 1)  f32   per-(image,band) channel sum of squares
    band = pl.program_id(1)

    # One MXU pass: (Cout_p, K*K*Cin) x (K*K*Cin, rt) -> f32 (Cout_p, rt).
    acc = jnp.dot(w_ref[...], x_ref[0], preferred_element_type=jnp.float32)
    y = acc + b_ref[...]                       # bias broadcast over lanes
    y_ref[0] = y.astype(y_ref.dtype)           # bf16 conv intermediate

    # Row-validity mask built in-kernel: flattened row r = h_out*wp + w_out is
    # valid iff (r % wp) < W and r < rows (drops wp-padding columns and the
    # lane-padding tail).  Pure VPU work, no DMA input needed.
    lane = lax.broadcasted_iota(jnp.int32, (1, rt), 1) + band * rt
    m = jnp.logical_and(lane % wp < w_valid, lane < rows).astype(jnp.float32)
    ym = y * m
    sum_ref[0, 0] = jnp.sum(ym, axis=1, keepdims=True)
    ssq_ref[0, 0] = jnp.sum(ym * y, axis=1, keepdims=True)


# ----------------------------------------------------------------------------
# Kernel 2: BatchNorm (mean folded into shift) + ReLU on the bf16 conv output.
# ----------------------------------------------------------------------------
def bn_relu_kernel(y_ref, scale_ref, shift_ref, o_ref):
    y = y_ref[0].astype(jnp.float32)           # (Cout_p, rt)
    o_ref[0] = jnp.maximum(y * scale_ref[...] + shift_ref[...], 0.0)


@functools.partial(jax.jit, static_argnames=("kernel_size", "eps"))
def conv2d_block_forward(x_nchw, weight, bias, gamma, beta, kernel_size, eps=1e-5):
    """Conv2d(padding=k//2) -> BatchNorm2d(batch stats) -> ReLU.  NCHW in/out."""
    n, cin, h, w = x_nchw.shape
    cout = weight.shape[0]
    k = kernel_size
    assert k % 2 == 1, "odd kernel_size expected (PyTorch 'same' padding k//2)"
    p = k // 2
    hp, wp = h + 2 * p, w + 2 * p
    rows = h * wp                    # flattened output row space: r = h_out*wp + w_out
    kkcin = k * k * cin
    cout_p = _round_up(cout, 8)      # channels live on sublanes -> pad to 8 only

    usable = int(_physical_vmem_bytes() * 0.85)

    # Row-band size: lane dim of every block, multiple of 128, sized so the
    # double-buffered varying blocks stay well inside VMEM (whole image if small).
    per_lane = kkcin * 2 + cout_p * 8          # bf16 patches + bf16 y + bf16/f32 y/out
    rt_cap = max(128, (((usable // 3) // (2 * per_lane)) // 128) * 128)
    rt = min(_round_up(rows, 128), rt_cap)
    rows_pad = _round_up(rows, rt)
    nbands = rows_pad // rt

    # ---- glue: build (N, K*K*Cin, rows_pad) patch tensor (no transpose at the end)
    # TODO(synk): for large K*K*Cin, gather the K*K shifted slices inside the
    #             kernel (VMEM) instead of materializing the K*K-fold-larger
    #             patch tensor in HBM.
    x_nhwc = jnp.transpose(x_nchw, (0, 2, 3, 1)).astype(jnp.float32)
    x_pad = jnp.pad(x_nhwc, ((0, 0), (p, p), (p, p), (0, 0)))
    x_flat = jnp.pad(x_pad.reshape(n, hp * wp, cin),
                     ((0, 0), (0, k - 1), (0, 0)))          # guard rows for last tap
    taps = [x_flat[:, kh * wp + kw: kh * wp + kw + rows, :]
            for kh in range(k) for kw in range(k)]
    patches = jnp.transpose(jnp.concatenate(taps, axis=-1), (0, 2, 1))  # (n, kkcin, rows)
    patches = jnp.pad(patches, ((0, 0), (0, 0), (0, rows_pad - rows)))
    patches = patches.astype(jnp.bfloat16)

    # PyTorch weight (Cout, Cin, K, K) -> (Cout_p, K*K*Cin), tap-major to match patches.
    w_flat = jnp.transpose(weight, (0, 2, 3, 1)).reshape(cout, kkcin)
    w_flat = jnp.pad(w_flat, ((0, cout_p - cout), (0, 0))).astype(jnp.bfloat16)
    b_col = jnp.pad(bias, (0, cout_p - cout)).reshape(cout_p, 1).astype(jnp.float32)

    # ---- Pallas kernel 1: fused conv + bias + per-(image,band) channel stats ----
    vary1 = rt * (kkcin * 2 + cout_p * 2) + 2 * cout_p * 4   # double-buffered blocks
    inv1 = cout_p * kkcin * 2 + cout_p * 4                   # grid-invariant blocks
    vmem1 = max(4 << 20, min(2 * vary1 + inv1 + (2 << 20), usable))

    conv_out, part_sum, part_ssq = pl.pallas_call(
        functools.partial(conv_stats_kernel, wp=wp, w_valid=w, rows=rows, rt=rt),
        out_shape=(
            jax.ShapeDtypeStruct((n, cout_p, rows_pad), jnp.bfloat16),
            jax.ShapeDtypeStruct((n, nbands, cout_p, 1), jnp.float32),
            jax.ShapeDtypeStruct((n, nbands, cout_p, 1), jnp.float32),
        ),
        grid_spec=pltpu.PrefetchScalarGridSpec(
            num_scalar_prefetch=0,
            grid=(n, nbands),
            in_specs=[
                pl.BlockSpec((1, kkcin, rt), lambda i, b: (i, 0, b)),
                pl.BlockSpec((cout_p, kkcin), lambda i, b: (0, 0)),
                pl.BlockSpec((cout_p, 1), lambda i, b: (0, 0)),
            ],
            out_specs=[
                pl.BlockSpec((1, cout_p, rt), lambda i, b: (i, 0, b)),
                pl.BlockSpec((1, 1, cout_p, 1), lambda i, b: (i, b, 0, 0)),
                pl.BlockSpec((1, 1, cout_p, 1), lambda i, b: (i, b, 0, 0)),
            ],
        ),
        compiler_params=pltpu.CompilerParams(
            dimension_semantics=("parallel", "parallel"),
            vmem_limit_bytes=int(vmem1)),
    )(patches, w_flat, b_col)

    # ---- tiny glue: finalize batch statistics, fold mean into shift ----
    m_count = jnp.float32(n * h * w)
    ch_sum = jnp.sum(part_sum, axis=(0, 1))        # (cout_p, 1)
    ch_ssq = jnp.sum(part_ssq, axis=(0, 1))
    mean = ch_sum / m_count
    # TODO(synk): single-pass E[y^2]-mean^2 can cancel for large-mean activations;
    #             a two-pass / Welford variance is safer.  Clamped at 0 here.
    var = jnp.maximum(ch_ssq / m_count - mean * mean, 0.0)
    gamma_col = jnp.pad(gamma, (0, cout_p - cout)).reshape(cout_p, 1).astype(jnp.float32)
    beta_col = jnp.pad(beta, (0, cout_p - cout)).reshape(cout_p, 1).astype(jnp.float32)
    scale = gamma_col * lax.rsqrt(var + eps)
    shift = beta_col - mean * scale                # BN mean folded into shift

    # ---- Pallas kernel 2: normalize + ReLU on the bf16 conv intermediate ----
    vary2 = rt * cout_p * (2 + 4)
    inv2 = 2 * cout_p * 4
    vmem2 = max(4 << 20, min(2 * vary2 + inv2 + (2 << 20), usable))

    out_rows = pl.pallas_call(
        bn_relu_kernel,
        out_shape=jax.ShapeDtypeStruct((n, cout_p, rows_pad), jnp.float32),
        grid_spec=pltpu.PrefetchScalarGridSpec(
            num_scalar_prefetch=0,
            grid=(n, nbands),
            in_specs=[
                pl.BlockSpec((1, cout_p, rt), lambda i, b: (i, 0, b)),
                pl.BlockSpec((cout_p, 1), lambda i, b: (0, 0)),
                pl.BlockSpec((cout_p, 1), lambda i, b: (0, 0)),
            ],
            out_specs=pl.BlockSpec((1, cout_p, rt), lambda i, b: (i, 0, b)),
        ),
        compiler_params=pltpu.CompilerParams(
            dimension_semantics=("parallel", "parallel"),
            vmem_limit_bytes=int(vmem2)),
    )(conv_out, scale, shift)

    # Channels already lead (post-batch): dropping padded rows/columns is a cheap
    # slice + reshape -- NCHW comes out directly, no transpose pass over HBM.
    out = out_rows[:, :cout, :rows].reshape(n, cout, h, wp)[:, :, :, :w]
    return out


def _reference_forward(x_nchw, weight, bias, gamma, beta, k, eps=1e-5):
    """Plain-JAX reference matching PyTorch Conv2d + BatchNorm2d(train) + ReLU."""
    y = lax.conv_general_dilated(
        x_nchw, weight, window_strides=(1, 1),
        padding=[(k // 2, k // 2), (k // 2, k // 2)],
        dimension_numbers=("NCHW", "OIHW", "NCHW"))
    y = y + bias.reshape(1, -1, 1, 1)
    mean = jnp.mean(y, axis=(0, 2, 3), keepdims=True)
    var = jnp.mean((y - mean) ** 2, axis=(0, 2, 3), keepdims=True)
    y = (y - mean) * lax.rsqrt(var + eps)
    y = y * gamma.reshape(1, -1, 1, 1) + beta.reshape(1, -1, 1, 1)
    return jnp.maximum(y, 0.0)


if __name__ == "__main__":
    # Module config: Conv2dBlock(in_channels=4, out_channels=8, kernel_size=3)
    N, CIN, H, W = 2, 4, 16, 16
    COUT, K = 8, 3

    key = jax.random.PRNGKey(0)
    kx, kw, kb = jax.random.split(key, 3)
    x = jax.random.normal(kx, (N, CIN, H, W), dtype=jnp.float32)
    weight = jax.random.normal(kw, (COUT, CIN, K, K), dtype=jnp.float32) * 0.1
    bias = jax.random.normal(kb, (COUT,), dtype=jnp.float32) * 0.1
    gamma = jnp.ones((COUT,), dtype=jnp.float32)   # BatchNorm2d default affine init
    beta = jnp.zeros((COUT,), dtype=jnp.float32)

    out = conv2d_block_forward(x, weight, bias, gamma, beta, kernel_size=K)
    out = jax.block_until_ready(out)

    # Reference with the same bf16 operand rounding the kernel uses (accumulation
    # and BN math stay f32 in both); the bf16 conv intermediate adds ~2^-9
    # relative rounding, well inside the tolerance below.
    xq = x.astype(jnp.bfloat16).astype(jnp.float32)
    wq = weight.astype(jnp.bfloat16).astype(jnp.float32)
    ref = _reference_forward(xq, wq, bias, gamma, beta, K)

    assert out.shape == (N, COUT, H, W)
    assert jnp.allclose(out, ref, rtol=1e-2, atol=1e-2), "mismatch vs reference"

    print("KERNEL_OK")
</pallas_src>

<mosaic_0001>
module attributes {stable_mosaic.version = 11 : i64} {
  func.func @conv_stats_kernel(%arg0: i32, %arg1: i32, %arg2: memref<1x36x384xbf16, #tpu.memory_space<vmem>>, %arg3: memref<8x36xbf16, #tpu.memory_space<vmem>>, %arg4: memref<8x1xf32, #tpu.memory_space<vmem>>, %arg5: memref<1x8x384xbf16, #tpu.memory_space<vmem>>, %arg6: memref<1x1x8x1xf32, #tpu.memory_space<vmem>>, %arg7: memref<1x1x8x1xf32, #tpu.memory_space<vmem>>) attributes {dimension_semantics = [#tpu.dimension_semantics<parallel>, #tpu.dimension_semantics<parallel>], iteration_bounds = array<i64: 2, 1>, scalar_prefetch = 0 : i64, scratch_operands = 0 : i64, tpu.core_type = #tpu.core_type<tc>, window_params = [{transform_indices = @transform_0, window_bounds = array<i64: 1, 36, 384>}, {pipeline_mode = #tpu.pipeline_mode<synchronous>, transform_indices = @transform_1, window_bounds = array<i64: 8, 36>}, {pipeline_mode = #tpu.pipeline_mode<synchronous>, transform_indices = @transform_2, window_bounds = array<i64: 8, 1>}, {transform_indices = @transform_3, window_bounds = array<i64: 1, 8, 384>}, {transform_indices = @transform_4, window_bounds = array<i64: 1, 1, 8, 1>}, {transform_indices = @transform_5, window_bounds = array<i64: 1, 1, 8, 1>}]} {
    %c0 = arith.constant 0 : index
    %c0_0 = arith.constant 0 : index
    %0 = vector.load %arg3[%c0, %c0_0] : memref<8x36xbf16, #tpu.memory_space<vmem>>, vector<8x36xbf16>
    %c0_1 = arith.constant 0 : index
    %c0_2 = arith.constant 0 : index
    %c0_3 = arith.constant 0 : index
    %1 = vector.load %arg2[%c0_1, %c0_2, %c0_3] : memref<1x36x384xbf16, #tpu.memory_space<vmem>>, vector<1x36x384xbf16>
    %2 = vector.shape_cast %1 : vector<1x36x384xbf16> to vector<36x384xbf16>
    %cst = arith.constant dense<0.000000e+00> : vector<8x384xf32>
    %3 = tpu.matmul %0, %2, %cst {dimension_numbers = #tpu.dot_dimension_numbers<[1], [0], [0], [1], [0, 0, 1, 1], [], []>} : vector<8x36xbf16>, vector<36x384xbf16>, vector<8x384xf32> -> vector<8x384xf32>
    %c0_4 = arith.constant 0 : index
    %c0_5 = arith.constant 0 : index
    %4 = vector.load %arg4[%c0_4, %c0_5] : memref<8x1xf32, #tpu.memory_space<vmem>>, vector<8x1xf32>
    %5 = vector.broadcast %4 : vector<8x1xf32> to vector<8x384xf32>
    %6 = arith.addf %3, %5 : vector<8x384xf32>
    %7 = arith.truncf %6 : vector<8x384xf32> to vector<8x384xbf16>
    %c0_6 = arith.constant 0 : index
    %c0_7 = arith.constant 0 : index
    %c0_8 = arith.constant 0 : index
    %8 = vector.load %arg5[%c0_6, %c0_7, %c0_8] : memref<1x8x384xbf16, #tpu.memory_space<vmem>>, vector<1x8x384xbf16>
    %9 = vector.shape_cast %8 : vector<1x8x384xbf16> to vector<8x384xbf16>
    %10 = vector.shape_cast %7 : vector<8x384xbf16> to vector<1x8x384xbf16>
    tpu.vector_store %arg5[%c0_6, %c0_7, %c0_8], %10 {strides = array<i32>} : memref<1x8x384xbf16, #tpu.memory_space<vmem>>, vector<1x8x384xbf16>,
    %11 = tpu.iota {dimensions = array<i32: 1>} : vector<1x384xi32>
    %c384_i32 = arith.constant 384 : i32
    %12 = arith.muli %arg1, %c384_i32 : i32
    %13 = vector.broadcast %12 : i32 to vector<1x384xi32>
    %14 = arith.addi %11, %13 : vector<1x384xi32>
    %c18_i32 = arith.constant 18 : i32
    %c0_i32 = arith.constant 0 : i32
    %15 = arith.cmpi eq, %c18_i32, %c0_i32 : i32
    %c1_i32 = arith.constant 1 : i32
    %16 = arith.select %15, %c1_i32, %c18_i32 : i32
    %17 = vector.broadcast %16 : i32 to vector<1x384xi32>
    %18 = arith.remsi %14, %17 : vector<1x384xi32>
    %c0_i32_9 = arith.constant 0 : i32
    %19 = vector.broadcast %c0_i32_9 : i32 to vector<1x384xi32>
    %20 = arith.cmpi ne, %18, %19 : vector<1x384xi32>
    %c0_i32_10 = arith.constant 0 : i32
    %21 = vector.broadcast %c0_i32_10 : i32 to vector<1x384xi32>
    %22 = arith.cmpi slt, %18, %21 : vector<1x384xi32>
    %c0_i32_11 = arith.constant 0 : i32
    %23 = arith.cmpi slt, %16, %c0_i32_11 : i32
    %24 = vector.broadcast %23 : i1 to vector<1x384xi1>
    %25 = vector.broadcast %24 : vector<1x384xi1> to vector<1x384xi1>
    %26 = arith.xori %22, %25 : vector<1x384xi1>
    %27 = arith.andi %26, %20 : vector<1x384xi1>
    %28 = vector.broadcast %16 : i32 to vector<1x384xi32>
    %29 = arith.addi %18, %28 : vector<1x384xi32>
    %30 = arith.select %27, %29, %18 : vector<1x384xi1>, vector<1x384xi32>
    %c16_i32 = arith.constant 16 : i32
    %31 = vector.broadcast %c16_i32 : i32 to vector<1x384xi32>
    %32 = arith.cmpi slt, %30, %31 : vector<1x384xi32>
    %c288_i32 = arith.constant 288 : i32
    %33 = vector.broadcast %c288_i32 : i32 to vector<1x384xi32>
    %34 = arith.cmpi slt, %14, %33 : vector<1x384xi32>
    %35 = arith.andi %32, %34 : vector<1x384xi1>
    %36 = arith.extui %35 : vector<1x384xi1> to vector<1x384xi32>
    %37 = arith.sitofp %36 : vector<1x384xi32> to vector<1x384xf32>
    %38 = vector.broadcast %37 : vector<1x384xf32> to vector<8x384xf32>
    %39 = arith.mulf %6, %38 : vector<8x384xf32>
    %cst_12 = arith.constant dense<0.000000e+00> : vector<8xf32>
    %40 = vector.multi_reduction <add>, %39, %cst_12 [1] : vector<8x384xf32> to vector<8xf32>
    %41 = vector.shape_cast %40 : vector<8xf32> to vector<8x1xf32>
    %c0_13 = arith.constant 0 : index
    %c0_14 = arith.constant 0 : index
    %c0_15 = arith.constant 0 : index
    %c0_16 = arith.constant 0 : index
    %42 = vector.load %arg6[%c0_13, %c0_14, %c0_15, %c0_16] : memref<1x1x8x1xf32, #tpu.memory_space<vmem>>, vector<1x1x8x1xf32>
    %43 = vector.shape_cast %42 : vector<1x1x8x1xf32> to vector<8x1xf32>
    %44 = vector.shape_cast %41 : vector<8x1xf32> to vector<1x1x8x1xf32>
    tpu.vector_store %arg6[%c0_13, %c0_14, %c0_15, %c0_16], %44 {strides = array<i32>} : memref<1x1x8x1xf32, #tpu.memory_space<vmem>>, vector<1x1x8x1xf32>,
    %45 = arith.mulf %39, %6 : vector<8x384xf32>
    %cst_17 = arith.constant dense<0.000000e+00> : vector<8xf32>
    %46 = vector.multi_reduction <add>, %45, %cst_17 [1] : vector<8x384xf32> to vector<8xf32>
    %47 = vector.shape_cast %46 : vector<8xf32> to vector<8x1xf32>
    %c0_18 = arith.constant 0 : index
    %c0_19 = arith.constant 0 : index
    %c0_20 = arith.constant 0 : index
    %c0_21 = arith.constant 0 : index
    %48 = vector.load %arg7[%c0_18, %c0_19, %c0_20, %c0_21] : memref<1x1x8x1xf32, #tpu.memory_space<vmem>>, vector<1x1x8x1xf32>
    %49 = vector.shape_cast %48 : vector<1x1x8x1xf32> to vector<8x1xf32>
    %50 = vector.shape_cast %47 : vector<8x1xf32> to vector<1x1x8x1xf32>
    tpu.vector_store %arg7[%c0_18, %c0_19, %c0_20, %c0_21], %50 {strides = array<i32>} : memref<1x1x8x1xf32, #tpu.memory_space<vmem>>, vector<1x1x8x1xf32>,
    return
  }
  func.func @transform_0(%arg0: i32, %arg1: i32) -> (i32, i32, i32) {
    %c0_i32 = arith.constant 0 : i32
    %c0_i32_0 = arith.constant 0 : i32
    return %arg0, %c0_i32, %arg1 : i32, i32, i32
  }
  func.func @transform_1(%arg0: i32, %arg1: i32) -> (i32, i32) {
    %c0_i32 = arith.constant 0 : i32
    %c0_i32_0 = arith.constant 0 : i32
    %c0_i32_1 = arith.constant 0 : i32
    return %c0_i32, %c0_i32_0 : i32, i32
  }
  func.func @transform_2(%arg0: i32, %arg1: i32) -> (i32, i32) {
    %c0_i32 = arith.constant 0 : i32
    %c0_i32_0 = arith.constant 0 : i32
    %c0_i32_1 = arith.constant 0 : i32
    return %c0_i32, %c0_i32_0 : i32, i32
  }
  func.func @transform_3(%arg0: i32, %arg1: i32) -> (i32, i32, i32) {
    %c0_i32 = arith.constant 0 : i32
    %c0_i32_0 = arith.constant 0 : i32
    return %arg0, %c0_i32, %arg1 : i32, i32, i32
  }
  func.func @transform_4(%arg0: i32, %arg1: i32) -> (i32, i32, i32, i32) {
    %c0_i32 = arith.constant 0 : i32
    %c0_i32_0 = arith.constant 0 : i32
    %c0_i32_1 = arith.constant 0 : i32
    return %arg0, %arg1, %c0_i32, %c0_i32_0 : i32, i32, i32, i32
  }
  func.func @transform_5(%arg0: i32, %arg1: i32) -> (i32, i32, i32, i32) {
    %c0_i32 = arith.constant 0 : i32
    %c0_i32_0 = arith.constant 0 : i32
    %c0_i32_1 = arith.constant 0 : i32
    return %arg0, %arg1, %c0_i32, %c0_i32_0 : i32, i32, i32, i32
  }
}

module attributes {stable_mosaic.version = 11 : i64} {
  func.func @bn_relu_kernel(%arg0: i32, %arg1: i32, %arg2: memref<1x8x384xbf16, #tpu.memory_space<vmem>>, %arg3: memref<8x1xf32, #tpu.memory_space<vmem>>, %arg4: memref<8x1xf32, #tpu.memory_space<vmem>>, %arg5: memref<1x8x384xf32, #tpu.memory_space<vmem>>) attributes {dimension_semantics = [#tpu.dimension_semantics<parallel>, #tpu.dimension_semantics<parallel>], iteration_bounds = array<i64: 2, 1>, scalar_prefetch = 0 : i64, scratch_operands = 0 : i64, tpu.core_type = #tpu.core_type<tc>, window_params = [{transform_indices = @transform_0, window_bounds = array<i64: 1, 8, 384>}, {pipeline_mode = #tpu.pipeline_mode<synchronous>, transform_indices = @transform_1, window_bounds = array<i64: 8, 1>}, {pipeline_mode = #tpu.pipeline_mode<synchronous>, transform_indices = @transform_2, window_bounds = array<i64: 8, 1>}, {transform_indices = @transform_3, window_bounds = array<i64: 1, 8, 384>}]} {
    %c0 = arith.constant 0 : index
    %c0_0 = arith.constant 0 : index
    %c0_1 = arith.constant 0 : index
    %0 = vector.load %arg2[%c0, %c0_0, %c0_1] : memref<1x8x384xbf16, #tpu.memory_space<vmem>>, vector<1x8x384xbf16>
    %1 = vector.shape_cast %0 : vector<1x8x384xbf16> to vector<8x384xbf16>
    %2 = arith.extf %1 : vector<8x384xbf16> to vector<8x384xf32>
    %c0_2 = arith.constant 0 : index
    %c0_3 = arith.constant 0 : index
    %3 = vector.load %arg3[%c0_2, %c0_3] : memref<8x1xf32, #tpu.memory_space<vmem>>, vector<8x1xf32>
    %4 = vector.broadcast %3 : vector<8x1xf32> to vector<8x384xf32>
    %5 = arith.mulf %2, %4 : vector<8x384xf32>
    %c0_4 = arith.constant 0 : index
    %c0_5 = arith.constant 0 : index
    %6 = vector.load %arg4[%c0_4, %c0_5] : memref<8x1xf32, #tpu.memory_space<vmem>>, vector<8x1xf32>
    %7 = vector.broadcast %6 : vector<8x1xf32> to vector<8x384xf32>
    %8 = arith.addf %5, %7 : vector<8x384xf32>
    %cst = arith.constant 0.000000e+00 : f32
    %9 = vector.broadcast %cst : f32 to vector<8x384xf32>
    %10 = arith.maximumf %8, %9 : vector<8x384xf32>
    %c0_6 = arith.constant 0 : index
    %c0_7 = arith.constant 0 : index
    %c0_8 = arith.constant 0 : index
    %11 = vector.load %arg5[%c0_6, %c0_7, %c0_8] : memref<1x8x384xf32, #tpu.memory_space<vmem>>, vector<1x8x384xf32>
    %12 = vector.shape_cast %11 : vector<1x8x384xf32> to vector<8x384xf32>
    %13 = vector.shape_cast %10 : vector<8x384xf32> to vector<1x8x384xf32>
    tpu.vector_store %arg5[%c0_6, %c0_7, %c0_8], %13 {strides = array<i32>} : memref<1x8x384xf32, #tpu.memory_space<vmem>>, vector<1x8x384xf32>,
    return
  }
  func.func @transform_0(%arg0: i32, %arg1: i32) -> (i32, i32, i32) {
    %c0_i32 = arith.constant 0 : i32
    %c0_i32_0 = arith.constant 0 : i32
    return %arg0, %c0_i32, %arg1 : i32, i32, i32
  }
  func.func @transform_1(%arg0: i32, %arg1: i32) -> (i32, i32) {
    %c0_i32 = arith.constant 0 : i32
    %c0_i32_0 = arith.constant 0 : i32
    %c0_i32_1 = arith.constant 0 : i32
    return %c0_i32, %c0_i32_0 : i32, i32
  }
  func.func @transform_2(%arg0: i32, %arg1: i32) -> (i32, i32) {
    %c0_i32 = arith.constant 0 : i32
    %c0_i32_0 = arith.constant 0 : i32
    %c0_i32_1 = arith.constant 0 : i32
    return %c0_i32, %c0_i32_0 : i32, i32
  }
  func.func @transform_3(%arg0: i32, %arg1: i32) -> (i32, i32, i32) {
    %c0_i32 = arith.constant 0 : i32
    %c0_i32_0 = arith.constant 0 : i32
    return %arg0, %c0_i32, %arg1 : i32, i32, i32
  }
}

</mosaic_0001>

<llo_original>
// kernel: conv2d_block_forward.3
$region0: #{conv2d_block_forward.3}
  #allocation0 [shape = 'u32[]', space=smem, size = 0x4, offset = 0x4, fixed_abs, tag = 'smem constant byte address 0x4 - core index']
  #allocation1 [shape = 'u32[72,128]{1,0:T(1,128)}', space=vmem, size = 0x9000, scoped, tag = 'internal scratch']
  %s0 = inlined_call_operand.vmem [shape: bf16[2,8,384], index: 0, kind: input, shape index: {}]
  %s1 = inlined_call_operand.vmem [shape: f32[8,1], index: 1, kind: input, shape index: {}]
  %s2 = inlined_call_operand.vmem [shape: f32[8,1], index: 2, kind: input, shape index: {}]
  %s3 = inlined_call_operand.vmem [shape: f32[2,8,384], index: 3, kind: output, shape index: {}]
  %s4 = sld [smem:[#allocation0]]
  $region45: #{conv2d_block_forward.3} parent=0
    _
  %s6 = ssub.s32 1, %s4
  %s7 = scalar_select 0, %s6, %s4
  loop: start=0, step=1, limit=4
  $region2: #{conv2d_block_forward.3} parent=0 // loop_pre_header
    _
  $region3: #{conv2d_block_forward.3} parent=0 // loop_header
    %s9 = sphi 0, %s13
    %p10 = scmp.ge.s32.totalorder %s9, 4
    %s16 = sphi 0, %s28
    %s17 = sphi 0, %s24
    %s18 = sphi 0, %s16
    %s19 = sphi 0, %s17
    %s20 = sphi 0, %s18
    %s21 = sphi 0, %s19
    %s33 = sphi 0, %s35
    %s36 = sphi 0, %s33
    %s37 = sphi 0, %s36
    %s53 = sphi 0, %s37
    %s57 = sphi 0, %s57
    %s59 = sphi 0, %s57
    %s60 = sphi 0, %s59
    %s74 = sphi 0, %s60
    %s78 = sphi 0, %s78
    %s80 = sphi 0, %s78
    %s81 = sphi 0, %s80
    %s95 = sphi 0, %s81
    %s103 = sphi 0, %s105
    %s106 = sphi 0, %s103
    %s107 = sphi 0, %s106
    %s123 = sphi 0, %s107
  $region4: #{conv2d_block_forward.3} parent=0 // loop_header_branch
    %12 = sbr.rel (%p10) target = $region8
  $region5: #{conv2d_block_forward.3} parent=0 // loop_body
    %s14 = ssub.s32 %s9, 1
    %s15 = ssub.s32 %s9, 2
    %s22 = sadd.s32 1, %s17
    %p23 = scmp.ge.s32.totalorder %s22, 1
    %s24 = scalar_select %p23, 0, %s22
    %s25 = sadd.s32 1, %s16
    %s26 = scalar_select %p23, %s25, %s16
    %p27 = scmp.ge.s32.totalorder %s26, 2
    %s28 = scalar_select %p27, 0, %s26
    %s29 = ssub.s32 %s16, %s28
    %s30 = ssub.s32 %s17, %s24
    %s31 = sor.u32 %s29, %s30
    %p32 = scmp.eq.s32.totalorder %s31, 0
    %s34 = sadd.s32 %s33, 1
    %s35 = scalar_select %p32, %s33, %s34
    %p38 = pneg %p32
    %p39 = scmp.eq.s32.totalorder %s9, 1
    %p40 = por %p38, %p39
    %p41 = scmp.ne.s32.totalorder %s33, %s36
    %p42 = scmp.eq.s32.totalorder %s9, 0
    %p43 = por %p41, %p42
    %p44 = scmp.ne.s32.totalorder %s33, %s36
    %p45 = scmp.eq.s32.totalorder %s14, 1
    %p46 = por %p44, %p45
    %p47 = scmp.ne.s32.totalorder %s36, %s37
    %p48 = scmp.eq.s32.totalorder %s14, 0
    %p49 = por %p47, %p48
    %p50 = scmp.ne.s32.totalorder %s36, %s37
    %p51 = scmp.eq.s32.totalorder %s15, 1
    %p52 = por %p50, %p51
    %p54 = scmp.ne.s32.totalorder %s37, %s53
    %p55 = scmp.eq.s32.totalorder %s15, 0
    %p56 = por %p54, %p55
    %s58 = sadd.s32 %s57, 1
    %p61 = scmp.eq.s32.totalorder %s9, 1
    %p62 = scmp.ne.s32.totalorder %s57, %s59
    %p63 = scmp.eq.s32.totalorder %s9, 0
    %p64 = por %p62, %p63
    %p65 = scmp.ne.s32.totalorder %s57, %s59
    %p66 = scmp.eq.s32.totalorder %s14, 1
    %p67 = por %p65, %p66
    %p68 = scmp.ne.s32.totalorder %s59, %s60
    %p69 = scmp.eq.s32.totalorder %s14, 0
    %p70 = por %p68, %p69
    %p71 = scmp.ne.s32.totalorder %s59, %s60
    %p72 = scmp.eq.s32.totalorder %s15, 1
    %p73 = por %p71, %p72
    %p75 = scmp.ne.s32.totalorder %s60, %s74
    %p76 = scmp.eq.s32.totalorder %s15, 0
    %p77 = por %p75, %p76
    %s79 = sadd.s32 %s78, 1
    %p82 = scmp.eq.s32.totalorder %s9, 1
    %p83 = scmp.ne.s32.totalorder %s78, %s80
    %p84 = scmp.eq.s32.totalorder %s9, 0
    %p85 = por %p83, %p84
    %p86 = scmp.ne.s32.totalorder %s78, %s80
    %p87 = scmp.eq.s32.totalorder %s14, 1
    %p88 = por %p86, %p87
    %p89 = scmp.ne.s32.totalorder %s80, %s81
    %p90 = scmp.eq.s32.totalorder %s14, 0
    %p91 = por %p89, %p90
    %p92 = scmp.ne.s32.totalorder %s80, %s81
    %p93 = scmp.eq.s32.totalorder %s15, 1
    %p94 = por %p92, %p93
    %p96 = scmp.ne.s32.totalorder %s81, %s95
    %p97 = scmp.eq.s32.totalorder %s15, 0
    %p98 = por %p96, %p97
    %s99 = ssub.s32 %s16, %s28
    %s100 = ssub.s32 %s17, %s24
    %s101 = sor.u32 %s99, %s100
    %p102 = scmp.eq.s32.totalorder %s101, 0
    %s104 = sadd.s32 %s103, 1
    %s105 = scalar_select %p102, %s103, %s104
    %p108 = pneg %p102
    %p109 = scmp.eq.s32.totalorder %s9, 1
    %p110 = por %p108, %p109
    %p111 = scmp.ne.s32.totalorder %s103, %s106
    %p112 = scmp.eq.s32.totalorder %s9, 0
    %p113 = por %p111, %p112
    %p114 = scmp.ne.s32.totalorder %s103, %s106
    %p115 = scmp.eq.s32.totalorder %s14, 1
    %p116 = por %p114, %p115
    %p117 = scmp.ne.s32.totalorder %s106, %s107
    %p118 = scmp.eq.s32.totalorder %s14, 0
    %p119 = por %p117, %p118
    %p120 = scmp.ne.s32.totalorder %s106, %s107
    %p121 = scmp.eq.s32.totalorder %s15, 1
    %p122 = por %p120, %p121
    %p124 = scmp.ne.s32.totalorder %s107, %s123
    %p125 = scmp.eq.s32.totalorder %s15, 0
    %p126 = por %p124, %p125
    %p127 = scmp.le.s32.totalorder 1, %s9
    %p128 = scmp.lt.s32.totalorder %s9, 3
    %p129 = pnand %p127, %p128
    %p130 = pneg %p129
    // Predicated region
    $region9: #{conv2d_block_forward.3} parent=5 // pred_check
      _
    $region10: #{conv2d_block_forward.3} parent=5 // pred_check_branch
      %132 = sbr.rel (%p129) target = $region12
    $region11: #{conv2d_block_forward.3} parent=5 // pred_region
      %s133 = ssub.s32 %s9, 1
      // Predicated region
      $region13: #{conv2d_block_forward.3} parent=11 // pred_check
        %p134 = pneg %p70
      $region14: #{conv2d_block_forward.3} parent=11 // pred_check_branch
        %136 = sbr.rel (%p134) target = $region16
      $region15: #{conv2d_block_forward.3} parent=11 // pred_region
        _
      $region16: #{conv2d_block_forward.3} parent=11 // pred_fallthru
        _
      // Predicated region
      $region17: #{conv2d_block_forward.3} parent=11 // pred_check
        %p137 = pneg %p91
      $region18: #{conv2d_block_forward.3} parent=11 // pred_check_branch
        %139 = sbr.rel (%p137) target = $region20
      $region19: #{conv2d_block_forward.3} parent=11 // pred_region
        _
      $region20: #{conv2d_block_forward.3} parent=11 // pred_fallthru
        _
    $region12: #{conv2d_block_forward.3} parent=5 // pred_fallthru
      _
    %p140 = scmp.lt.s32.totalorder %s9, 2
    // Predicated region
    $region21: #{conv2d_block_forward.3} parent=5 // pred_check
      %p141 = pneg %p140
    $region22: #{conv2d_block_forward.3} parent=5 // pred_check_branch
      %143 = sbr.rel (%p141) target = $region24
    $region23: #{conv2d_block_forward.3} parent=5 // pred_region
      // Predicated region
      $region25: #{conv2d_block_forward.3} parent=23 // pred_check
        %p144 = pneg %p43
      $region26: #{conv2d_block_forward.3} parent=23 // pred_check_branch
        %146 = sbr.rel (%p144) target = $region28
      $region27: #{conv2d_block_forward.3} parent=23 // pred_region
        %s147 = smul.u32 3, %s17
        %p148 = scmp.lt.s32.totalorder %s16, 1
        %s149 = scalar_select %p148, %s16, 1
        %p150 = scmp.lt.s32.totalorder %s147, 2
        %s151 = scalar_select %p150, %s147, 2
        %s152 = smul.addr %s149, 3
        %s153 = sadd.s32 %s151, %s152
        %s154 = smul.addr %s153, 4
        %s155 = scalar_lea.vmem %s0, %s154
        %s156 = smul.u32 3, %s17
      $region28: #{conv2d_block_forward.3} parent=23 // pred_fallthru
        _
    $region24: #{conv2d_block_forward.3} parent=5 // pred_fallthru
      _
    %p157 = scmp.le.s32.totalorder 1, %s9
    %p158 = scmp.lt.s32.totalorder %s9, 3
    %p159 = pnand %p157, %p158
    %p160 = pneg %p159
    // Predicated region
    $region29: #{conv2d_block_forward.3} parent=5 // pred_check
      _
    $region30: #{conv2d_block_forward.3} parent=5 // pred_check_branch
      %162 = sbr.rel (%p159) target = $region32
    $region31: #{conv2d_block_forward.3} parent=5 // pred_region
      %s163 = ssub.s32 %s9, 1
      %s164 = smul.u32 3, %s19
      %p165 = scmp.lt.s32.totalorder %s18, 1
      %s166 = scalar_select %p165, %s18, 1
      %p167 = scmp.lt.s32.totalorder %s164, 2
      %s168 = scalar_select %p167, %s164, 2
      %s169 = smul.addr %s166, 3
      %s170 = sadd.s32 %s168, %s169
      %s171 = smul.addr %s170, 4
      %s172 = scalar_lea.vmem %s0, %s171
      %p173 = pneg %p49
      %p174 = pneg %p46
      %p175 = pneg %p70
      %p176 = pneg %p67
      %p177 = pneg %p91
      %p178 = pneg %p88
      %p179 = pneg %p119
      %p180 = pneg %p116
      %s181 = smul.u32 3, %s19
      %p182 = scmp.lt.s32.totalorder %s18, 1
      %s183 = scalar_select %p182, %s18, 1
      %p184 = scmp.lt.s32.totalorder %s181, 2
      %s185 = scalar_select %p184, %s181, 2
      %s186 = smul.addr %s183, 3
      %s187 = sadd.s32 %s185, %s186
      %s188 = smul.addr %s187, 8
      %s189 = scalar_lea.vmem %s3, %s188
      %s190 = smul.u32 3, %s19
      %p191 = scmp.lt.s32.totalorder %s18, 1
      %s192 = scalar_select %p191, %s18, 1
      %p193 = scmp.lt.s32.totalorder %s190, 2
      %s194 = scalar_select %p193, %s190, 2
      %s195 = smul.addr %s192, 3
      %s196 = sadd.s32 %s194, %s195
      %s197 = smul.addr %s196, 4
      %s198 = scalar_lea.vmem %s0, %s197
      %s199 = smul.u32 3, %s19
      %s200 = smul.u32 3, %s19
      %p201 = scmp.lt.s32.totalorder %s18, 1
      %s202 = scalar_select %p201, %s18, 1
      %p203 = scmp.lt.s32.totalorder %s200, 2
      %s204 = scalar_select %p203, %s200, 2
      %s205 = smul.addr %s202, 3
      %s206 = sadd.s32 %s204, %s205
      %s207 = smul.addr %s206, 8
      %s208 = scalar_lea.vmem %s3, %s207
      %s209 = smul.u32 3, %s19
      %v210 = vld [vmem:[%s198] sm:$0xff]
      %v211 = vld [vmem:[%s198 + $0x8] sm:$0xf]
      %v212 = vunpack.c.l.bf16 %v210
      %v213 = vunpack.c.h.bf16 %v210
      %v214 = vunpack.c.l.bf16 %v211
      %v215 = vld [vmem:[%s1] sm:$0xff]
      %217 = vset.pattern.permute.xlu0 0
      %218 = vperm.xlu0 %217, %v215
      %v219 = vpop.permute.xlu0 %218
      %v221 = vmul.f32 %v212, %v219
      %v222 = vmul.f32 %v213, %v219
      %v223 = vmul.f32 %v214, %v219
      %v224 = vld [vmem:[%s2] sm:$0xff]
      %226 = vset.pattern.permute.xlu0 0
      %227 = vperm.xlu0 %226, %v224
      %v228 = vpop.permute.xlu0 %227
      %v230 = vadd.f32 %v221, %v228
      %v231 = vadd.f32 %v222, %v228
      %v232 = vadd.f32 %v223, %v228
      %v233 = vmax.f32 %v230, 0.0
      %v234 = vmax.f32 %v231, 0.0
      %v235 = vmax.f32 %v232, 0.0
      %236 = vst [vmem:[%s208] sm:$0xff] %v233
      %237 = vst [vmem:[%s208 + $0x8] sm:$0xff] %v234
      %238 = vst [vmem:[%s208 + $0x10] sm:$0xff] %v235
      %s239 = smul.u32 3, %s19
      %p240 = scmp.lt.s32.totalorder %s18, 1
      %s241 = scalar_select %p240, %s18, 1
      %p242 = scmp.lt.s32.totalorder %s239, 2
      %s243 = scalar_select %p242, %s239, 2
      %s244 = smul.addr %s241, 3
      %s245 = sadd.s32 %s243, %s244
      %s246 = smul.addr %s245, 8
      %s247 = scalar_lea.vmem %s3, %s246
      // Predicated region
      $region33: #{conv2d_block_forward.3} parent=31 // pred_check
        %p248 = pneg %p116
      $region34: #{conv2d_block_forward.3} parent=31 // pred_check_branch
        %250 = sbr.rel (%p248) target = $region36
      $region35: #{conv2d_block_forward.3} parent=31 // pred_region
        %s251 = smul.u32 3, %s19
      $region36: #{conv2d_block_forward.3} parent=31 // pred_fallthru
        _
    $region32: #{conv2d_block_forward.3} parent=5 // pred_fallthru
      _
    %p252 = scmp.le.s32.totalorder 2, %s9
    // Predicated region
    $region37: #{conv2d_block_forward.3} parent=5 // pred_check
      %p253 = pneg %p252
    $region38: #{conv2d_block_forward.3} parent=5 // pred_check_branch
      %255 = sbr.rel (%p253) target = $region40
    $region39: #{conv2d_block_forward.3} parent=5 // pred_region
      %s256 = ssub.s32 %s9, 2
      // Predicated region
      $region41: #{conv2d_block_forward.3} parent=39 // pred_check
        %p257 = pneg %p122
      $region42: #{conv2d_block_forward.3} parent=39 // pred_check_branch
        %259 = sbr.rel (%p257) target = $region44
      $region43: #{conv2d_block_forward.3} parent=39 // pred_region
        %s260 = smul.u32 3, %s21
        %p261 = scmp.lt.s32.totalorder %s20, 1
        %s262 = scalar_select %p261, %s20, 1
        %p263 = scmp.lt.s32.totalorder %s260, 2
        %s264 = scalar_select %p263, %s260, 2
        %s265 = smul.addr %s262, 3
        %s266 = sadd.s32 %s264, %s265
        %s267 = smul.addr %s266, 8
        %s268 = scalar_lea.vmem %s3, %s267
      $region44: #{conv2d_block_forward.3} parent=39 // pred_fallthru
        _
    $region40: #{conv2d_block_forward.3} parent=5 // pred_fallthru
      _
  $region6: #{conv2d_block_forward.3} parent=0 // loop_footer
    %s13 = sadd.s32 1, %s9
  $region7: #{conv2d_block_forward.3} parent=0 // loop_footer_branch
    %8 = sbr.rel target = $region3
  $region8: #{conv2d_block_forward.3} parent=0 // loop_exit
    _

// kernel: conv2d_block_forward.2
$region0: #{conv2d_block_forward.2}
  #allocation0 [shape = 'u32[]', space=smem, size = 0x4, offset = 0x4, fixed_abs, tag = 'smem constant byte address 0x4 - core index']
  #allocation1 [shape = 'u32[72,128]{1,0:T(1,128)}', space=vmem, size = 0x9000, scoped, tag = 'internal scratch']
  %s0 = inlined_call_operand.vmem [shape: bf16[2,36,384], index: 0, kind: input, shape index: {}]
  %s1 = inlined_call_operand.vmem [shape: bf16[8,36], index: 1, kind: input, shape index: {}]
  %s2 = inlined_call_operand.vmem [shape: f32[8,1], index: 2, kind: input, shape index: {}]
  %s3 = inlined_call_operand.vmem [shape: bf16[2,8,384], index: 3, kind: output, shape index: {0}]
  %s4 = inlined_call_operand.vmem [shape: f32[2,1,8,1], index: 4, kind: output, shape index: {1}]
  %s5 = inlined_call_operand.vmem [shape: f32[2,1,8,1], index: 5, kind: output, shape index: {2}]
  %6 = xla_tuple %s3, %s4, %s5
  %s7 = sld [smem:[#allocation0]]
  $region61: #{conv2d_block_forward.2} parent=0
    _
  %s9 = ssub.s32 1, %s7
  %s10 = scalar_select 0, %s9, %s7
  loop: start=0, step=1, limit=4
  $region2: #{conv2d_block_forward.2} parent=0 // loop_pre_header
    _
  $region3: #{conv2d_block_forward.2} parent=0 // loop_header
    %s12 = sphi 0, %s16
    %p13 = scmp.ge.s32.totalorder %s12, 4
    %s19 = sphi 0, %s31
    %s20 = sphi 0, %s27
    %s21 = sphi 0, %s19
    %s22 = sphi 0, %s20
    %s23 = sphi 0, %s21
    %s24 = sphi 0, %s22
    %s36 = sphi 0, %s38
    %s39 = sphi 0, %s36
    %s40 = sphi 0, %s39
    %s56 = sphi 0, %s40
    %s60 = sphi 0, %s60
    %s62 = sphi 0, %s60
    %s63 = sphi 0, %s62
    %s77 = sphi 0, %s63
    %s81 = sphi 0, %s81
    %s83 = sphi 0, %s81
    %s84 = sphi 0, %s83
    %s98 = sphi 0, %s84
    %s106 = sphi 0, %s108
    %s109 = sphi 0, %s106
    %s110 = sphi 0, %s109
    %s126 = sphi 0, %s110
    %s134 = sphi 0, %s136
    %s137 = sphi 0, %s134
    %s138 = sphi 0, %s137
    %s154 = sphi 0, %s138
    %s162 = sphi 0, %s164
    %s165 = sphi 0, %s162
    %s166 = sphi 0, %s165
    %s182 = sphi 0, %s166
  $region4: #{conv2d_block_forward.2} parent=0 // loop_header_branch
    %15 = sbr.rel (%p13) target = $region8
  $region5: #{conv2d_block_forward.2} parent=0 // loop_body
    %s17 = ssub.s32 %s12, 1
    %s18 = ssub.s32 %s12, 2
    %s25 = sadd.s32 1, %s20
    %p26 = scmp.ge.s32.totalorder %s25, 1
    %s27 = scalar_select %p26, 0, %s25
    %s28 = sadd.s32 1, %s19
    %s29 = scalar_select %p26, %s28, %s19
    %p30 = scmp.ge.s32.totalorder %s29, 2
    %s31 = scalar_select %p30, 0, %s29
    %s32 = ssub.s32 %s19, %s31
    %s33 = ssub.s32 %s20, %s27
    %s34 = sor.u32 %s32, %s33
    %p35 = scmp.eq.s32.totalorder %s34, 0
    %s37 = sadd.s32 %s36, 1
    %s38 = scalar_select %p35, %s36, %s37
    %p41 = pneg %p35
    %p42 = scmp.eq.s32.totalorder %s12, 1
    %p43 = por %p41, %p42
    %p44 = scmp.ne.s32.totalorder %s36, %s39
    %p45 = scmp.eq.s32.totalorder %s12, 0
    %p46 = por %p44, %p45
    %p47 = scmp.ne.s32.totalorder %s36, %s39
    %p48 = scmp.eq.s32.totalorder %s17, 1
    %p49 = por %p47, %p48
    %p50 = scmp.ne.s32.totalorder %s39, %s40
    %p51 = scmp.eq.s32.totalorder %s17, 0
    %p52 = por %p50, %p51
    %p53 = scmp.ne.s32.totalorder %s39, %s40
    %p54 = scmp.eq.s32.totalorder %s18, 1
    %p55 = por %p53, %p54
    %p57 = scmp.ne.s32.totalorder %s40, %s56
    %p58 = scmp.eq.s32.totalorder %s18, 0
    %p59 = por %p57, %p58
    %s61 = sadd.s32 %s60, 1
    %p64 = scmp.eq.s32.totalorder %s12, 1
    %p65 = scmp.ne.s32.totalorder %s60, %s62
    %p66 = scmp.eq.s32.totalorder %s12, 0
    %p67 = por %p65, %p66
    %p68 = scmp.ne.s32.totalorder %s60, %s62
    %p69 = scmp.eq.s32.totalorder %s17, 1
    %p70 = por %p68, %p69
    %p71 = scmp.ne.s32.totalorder %s62, %s63
    %p72 = scmp.eq.s32.totalorder %s17, 0
    %p73 = por %p71, %p72
    %p74 = scmp.ne.s32.totalorder %s62, %s63
    %p75 = scmp.eq.s32.totalorder %s18, 1
    %p76 = por %p74, %p75
    %p78 = scmp.ne.s32.totalorder %s63, %s77
    %p79 = scmp.eq.s32.totalorder %s18, 0
    %p80 = por %p78, %p79
    %s82 = sadd.s32 %s81, 1
    %p85 = scmp.eq.s32.totalorder %s12, 1
    %p86 = scmp.ne.s32.totalorder %s81, %s83
    %p87 = scmp.eq.s32.totalorder %s12, 0
    %p88 = por %p86, %p87
    %p89 = scmp.ne.s32.totalorder %s81, %s83
    %p90 = scmp.eq.s32.totalorder %s17, 1
    %p91 = por %p89, %p90
    %p92 = scmp.ne.s32.totalorder %s83, %s84
    %p93 = scmp.eq.s32.totalorder %s17, 0
    %p94 = por %p92, %p93
    %p95 = scmp.ne.s32.totalorder %s83, %s84
    %p96 = scmp.eq.s32.totalorder %s18, 1
    %p97 = por %p95, %p96
    %p99 = scmp.ne.s32.totalorder %s84, %s98
    %p100 = scmp.eq.s32.totalorder %s18, 0
    %p101 = por %p99, %p100
    %s102 = ssub.s32 %s19, %s31
    %s103 = ssub.s32 %s20, %s27
    %s104 = sor.u32 %s102, %s103
    %p105 = scmp.eq.s32.totalorder %s104, 0
    %s107 = sadd.s32 %s106, 1
    %s108 = scalar_select %p105, %s106, %s107
    %p111 = pneg %p105
    %p112 = scmp.eq.s32.totalorder %s12, 1
    %p113 = por %p111, %p112
    %p114 = scmp.ne.s32.totalorder %s106, %s109
    %p115 = scmp.eq.s32.totalorder %s12, 0
    %p116 = por %p114, %p115
    %p117 = scmp.ne.s32.totalorder %s106, %s109
    %p118 = scmp.eq.s32.totalorder %s17, 1
    %p119 = por %p117, %p118
    %p120 = scmp.ne.s32.totalorder %s109, %s110
    %p121 = scmp.eq.s32.totalorder %s17, 0
    %p122 = por %p120, %p121
    %p123 = scmp.ne.s32.totalorder %s109, %s110
    %p124 = scmp.eq.s32.totalorder %s18, 1
    %p125 = por %p123, %p124
    %p127 = scmp.ne.s32.totalorder %s110, %s126
    %p128 = scmp.eq.s32.totalorder %s18, 0
    %p129 = por %p127, %p128
    %s130 = ssub.s32 %s19, %s31
    %s131 = ssub.s32 %s20, %s27
    %s132 = sor.u32 %s130, %s131
    %p133 = scmp.eq.s32.totalorder %s132, 0
    %s135 = sadd.s32 %s134, 1
    %s136 = scalar_select %p133, %s134, %s135
    %p139 = pneg %p133
    %p140 = scmp.eq.s32.totalorder %s12, 1
    %p141 = por %p139, %p140
    %p142 = scmp.ne.s32.totalorder %s134, %s137
    %p143 = scmp.eq.s32.totalorder %s12, 0
    %p144 = por %p142, %p143
    %p145 = scmp.ne.s32.totalorder %s134, %s137
    %p146 = scmp.eq.s32.totalorder %s17, 1
    %p147 = por %p145, %p146
    %p148 = scmp.ne.s32.totalorder %s137, %s138
    %p149 = scmp.eq.s32.totalorder %s17, 0
    %p150 = por %p148, %p149
    %p151 = scmp.ne.s32.totalorder %s137, %s138
    %p152 = scmp.eq.s32.totalorder %s18, 1
    %p153 = por %p151, %p152
    %p155 = scmp.ne.s32.totalorder %s138, %s154
    %p156 = scmp.eq.s32.totalorder %s18, 0
    %p157 = por %p155, %p156
    %s158 = ssub.s32 %s19, %s31
    %s159 = ssub.s32 %s20, %s27
    %s160 = sor.u32 %s158, %s159
    %p161 = scmp.eq.s32.totalorder %s160, 0
    %s163 = sadd.s32 %s162, 1
    %s164 = scalar_select %p161, %s162, %s163
    %p167 = pneg %p161
    %p168 = scmp.eq.s32.totalorder %s12, 1
    %p169 = por %p167, %p168
    %p170 = scmp.ne.s32.totalorder %s162, %s165
    %p171 = scmp.eq.s32.totalorder %s12, 0
    %p172 = por %p170, %p171
    %p173 = scmp.ne.s32.totalorder %s162, %s165
    %p174 = scmp.eq.s32.totalorder %s17, 1
    %p175 = por %p173, %p174
    %p176 = scmp.ne.s32.totalorder %s165, %s166
    %p177 = scmp.eq.s32.totalorder %s17, 0
    %p178 = por %p176, %p177
    %p179 = scmp.ne.s32.totalorder %s165, %s166
    %p180 = scmp.eq.s32.totalorder %s18, 1
    %p181 = por %p179, %p180
    %p183 = scmp.ne.s32.totalorder %s166, %s182
    %p184 = scmp.eq.s32.totalorder %s18, 0
    %p185 = por %p183, %p184
    %p186 = scmp.le.s32.totalorder 1, %s12
    %p187 = scmp.lt.s32.totalorder %s12, 3
    %p188 = pnand %p186, %p187
    %p189 = pneg %p188
    // Predicated region
    $region9: #{conv2d_block_forward.2} parent=5 // pred_check
      _
    $region10: #{conv2d_block_forward.2} parent=5 // pred_check_branch
      %191 = sbr.rel (%p188) target = $region12
    $region11: #{conv2d_block_forward.2} parent=5 // pred_region
      %s192 = ssub.s32 %s12, 1
      // Predicated region
      $region13: #{conv2d_block_forward.2} parent=11 // pred_check
        %p193 = pneg %p73
      $region14: #{conv2d_block_forward.2} parent=11 // pred_check_branch
        %195 = sbr.rel (%p193) target = $region16
      $region15: #{conv2d_block_forward.2} parent=11 // pred_region
        _
      $region16: #{conv2d_block_forward.2} parent=11 // pred_fallthru
        _
      // Predicated region
      $region17: #{conv2d_block_forward.2} parent=11 // pred_check
        %p196 = pneg %p94
      $region18: #{conv2d_block_forward.2} parent=11 // pred_check_branch
        %198 = sbr.rel (%p196) target = $region20
      $region19: #{conv2d_block_forward.2} parent=11 // pred_region
        _
      $region20: #{conv2d_block_forward.2} parent=11 // pred_fallthru
        _
    $region12: #{conv2d_block_forward.2} parent=5 // pred_fallthru
      _
    %p199 = scmp.lt.s32.totalorder %s12, 2
    // Predicated region
    $region21: #{conv2d_block_forward.2} parent=5 // pred_check
      %p200 = pneg %p199
    $region22: #{conv2d_block_forward.2} parent=5 // pred_check_branch
      %202 = sbr.rel (%p200) target = $region24
    $region23: #{conv2d_block_forward.2} parent=5 // pred_region
      // Predicated region
      $region25: #{conv2d_block_forward.2} parent=23 // pred_check
        %p203 = pneg %p46
      $region26: #{conv2d_block_forward.2} parent=23 // pred_check_branch
        %205 = sbr.rel (%p203) target = $region28
      $region27: #{conv2d_block_forward.2} parent=23 // pred_region
        %s206 = smul.u32 3, %s20
        %p207 = scmp.lt.s32.totalorder %s19, 1
        %s208 = scalar_select %p207, %s19, 1
        %p209 = scmp.lt.s32.totalorder %s206, 2
        %s210 = scalar_select %p209, %s206, 2
        %s211 = smul.addr %s208, 15
        %s212 = sadd.s32 %s210, %s211
        %s213 = smul.addr %s212, 4
        %s214 = scalar_lea.vmem %s0, %s213
        %s215 = smul.u32 3, %s20
      $region28: #{conv2d_block_forward.2} parent=23 // pred_fallthru
        _
    $region24: #{conv2d_block_forward.2} parent=5 // pred_fallthru
      _
    %p216 = scmp.le.s32.totalorder 1, %s12
    %p217 = scmp.lt.s32.totalorder %s12, 3
    %p218 = pnand %p216, %p217
    %p219 = pneg %p218
    // Predicated region
    $region29: #{conv2d_block_forward.2} parent=5 // pred_check
      _
    $region30: #{conv2d_block_forward.2} parent=5 // pred_check_branch
      %221 = sbr.rel (%p218) target = $region32
    $region31: #{conv2d_block_forward.2} parent=5 // pred_region
      %s222 = ssub.s32 %s12, 1
      %s223 = smul.u32 3, %s22
      %p224 = scmp.lt.s32.totalorder %s21, 1
      %s225 = scalar_select %p224, %s21, 1
      %p226 = scmp.lt.s32.totalorder %s223, 2
      %s227 = scalar_select %p226, %s223, 2
      %s228 = smul.addr %s225, 15
      %s229 = sadd.s32 %s227, %s228
      %s230 = smul.addr %s229, 4
      %s231 = scalar_lea.vmem %s0, %s230
      %p232 = pneg %p52
      %p233 = pneg %p49
      %p234 = pneg %p73
      %p235 = pneg %p70
      %p236 = pneg %p94
      %p237 = pneg %p91
      %p238 = pneg %p122
      %p239 = pneg %p119
      %s240 = smul.u32 3, %s22
      %p241 = scmp.lt.s32.totalorder %s21, 1
      %s242 = scalar_select %p241, %s21, 1
      %p243 = scmp.lt.s32.totalorder %s240, 2
      %s244 = scalar_select %p243, %s240, 2
      %s245 = smul.addr %s242, 3
      %s246 = sadd.s32 %s244, %s245
      %s247 = smul.addr %s246, 4
      %s248 = scalar_lea.vmem %s3, %s247
      %p249 = pneg %p150
      %p250 = pneg %p147
      %p251 = scmp.lt.s32.totalorder %s21, 1
      %s252 = scalar_select %p251, %s21, 1
      %p253 = scmp.lt.s32.totalorder %s22, 0
      %s254 = scalar_select %p253, %s22, 0
      %s255 = sadd.s32 %s254, %s252
      %s256 = smul.addr %s255, 8
      %s257 = scalar_lea.vmem %s4, %s256
      %p258 = pneg %p178
      %p259 = pneg %p175
      %p260 = scmp.lt.s32.totalorder %s21, 1
      %s261 = scalar_select %p260, %s21, 1
      %p262 = scmp.lt.s32.totalorder %s22, 0
      %s263 = scalar_select %p262, %s22, 0
      %s264 = sadd.s32 %s263, %s261
      %s265 = smul.addr %s264, 8
      %s266 = scalar_lea.vmem %s5, %s265
      %s267 = smul.u32 3, %s22
      %p268 = scmp.lt.s32.totalorder %s21, 1
      %s269 = scalar_select %p268, %s21, 1
      %p270 = scmp.lt.s32.totalorder %s267, 2
      %s271 = scalar_select %p270, %s267, 2
      %s272 = smul.addr %s269, 15
      %s273 = sadd.s32 %s271, %s272
      %s274 = smul.addr %s273, 4
      %s275 = scalar_lea.vmem %s0, %s274
      %s276 = smul.u32 3, %s22
      %s277 = smul.u32 3, %s22
      %p278 = scmp.lt.s32.totalorder %s21, 1
      %s279 = scalar_select %p278, %s21, 1
      %p280 = scmp.lt.s32.totalorder %s277, 2
      %s281 = scalar_select %p280, %s277, 2
      %s282 = smul.addr %s279, 3
      %s283 = sadd.s32 %s281, %s282
      %s284 = smul.addr %s283, 4
      %s285 = scalar_lea.vmem %s3, %s284
      %s286 = smul.u32 3, %s22
      %p287 = scmp.lt.s32.totalorder %s21, 1
      %s288 = scalar_select %p287, %s21, 1
      %p289 = scmp.lt.s32.totalorder %s22, 0
      %s290 = scalar_select %p289, %s22, 0
      %s291 = sadd.s32 %s290, %s288
      %s292 = smul.addr %s291, 8
      %s293 = scalar_lea.vmem %s4, %s292
      %p294 = scmp.lt.s32.totalorder %s21, 1
      %s295 = scalar_select %p294, %s21, 1
      %p296 = scmp.lt.s32.totalorder %s22, 0
      %s297 = scalar_select %p296, %s22, 0
      %s298 = sadd.s32 %s297, %s295
      %s299 = smul.addr %s298, 8
      %s300 = scalar_lea.vmem %s5, %s299
      %v302 = vld [vmem:[%s1] sm:$0xf]
      %v303 = vld [vmem:[%s275] sm:$0xff]
      %v304 = vld [vmem:[%s275 + $0x8] sm:$0xf]
      %v305 = vld [vmem:[%s275 + $0xc] sm:$0xff]
      %v306 = vld [vmem:[%s275 + $0x14] sm:$0xf]
      %v307 = vld [vmem:[%s275 + $0x18] sm:$0xff]
      %v308 = vld [vmem:[%s275 + $0x20] sm:$0xf]
      %v309 = vld [vmem:[%s275 + $0x24] sm:$0xff]
      %v310 = vld [vmem:[%s275 + $0x2c] sm:$0xf]
      %v311 = vld [vmem:[%s275 + $0x30] sm:$0x33]
      %v312 = vld [vmem:[%s275 + $0x38] sm:$0x3]
      %v313 = vld [vmem:[%s2] sm:$0xff]
      %315 = vset.pattern.permute.xlu0 0
      %316 = vperm.xlu0 %315, %v313
      %v317 = vpop.permute.xlu0 %316
      %v329 = vunpack.c.l.b16 %v303
      %v330 = vunpack.c.h.b16 %v303
      %v331 = vunpack.c.l.b16 %v304
      %v332 = vunpack.c.l.b16 %v305
      %v333 = vunpack.c.h.b16 %v305
      %v334 = vunpack.c.l.b16 %v306
      %v335 = vunpack.c.l.b16 %v307
      %v336 = vunpack.c.h.b16 %v307
      %v337 = vunpack.c.l.b16 %v308
      %v338 = vunpack.c.l.b16 %v309
      %v339 = vunpack.c.h.b16 %v309
      %v340 = vunpack.c.l.b16 %v310
      %v341 = vunpack.c.l.b16 %v311
      %v342 = vunpack.c.h.b16 %v311
      %v343 = vunpack.c.l.b16 %v312
      %v344 = vpack.c.b16 %v332, %v329
      %v345 = vpack.c.b16 %v333, %v330
      %v346 = vpack.c.b16 %v334, %v331
      %v347 = vpack.c.b16 %v338, %v335
      %v348 = vpack.c.b16 %v339, %v336
      %v349 = vpack.c.b16 %v340, %v337
      %v350 = vpack.c.b16 %v341, %v341
      %v351 = vpack.c.b16 %v342, %v342
      %v352 = vpack.c.b16 %v343, %v343
      %vm359 = vcmask 293888
      %v361 = vsel %vm359, %v302, 0
      %vm363 = vcmask 1041408
      %v365 = vsel %vm363, %v350, 0
      %v368 = vsel %vm363, %v351, 0
      %v371 = vsel %vm363, %v352, 0
      %373 = vmatpush.bf16.msra.mxu0 0
      %374 = vmatpush.bf16.msra.mxu0 0
      %375 = vmatpush.bf16.msra.mxu0 0
      %376 = vmatpush.bf16.msra.mxu0 0
      %377 = vmatpush.bf16.msra.mxu0 0
      %378 = vmatpush.bf16.msra.mxu0 %v365
      %379 = vmatpush.bf16.msra.mxu0 %v347
      %380 = vmatpush.bf16.msra.mxu0 %v344
      %381 = vmatmul.bf16.gmra.mxu0 %v361
      %v382 = vpop.f32.mrf.mxu0
      %v383 = vadd.f32 %v317, %v382
      %v384 = vpop.f32.mrf.mxu0
      %385 = vdwg.mxu0
      %386 = vmatpush.bf16.msra.mxu0 0
      %387 = vmatpush.bf16.msra.mxu0 0
      %388 = vmatpush.bf16.msra.mxu0 0
      %389 = vmatpush.bf16.msra.mxu0 0
      %390 = vmatpush.bf16.msra.mxu0 0
      %391 = vmatpush.bf16.msra.mxu0 %v368
      %392 = vmatpush.bf16.msra.mxu0 %v348
      %393 = vmatpush.bf16.msra.mxu0 %v345
      %394 = vmatmul.bf16.gmra.mxu0 %v361
      %v395 = vpop.f32.mrf.mxu0
      %v396 = vadd.f32 %v317, %v395
      %v397 = vpop.f32.mrf.mxu0
      %398 = vdwg.mxu0
      %399 = vmatpush.bf16.msra.mxu0 0
      %400 = vmatpush.bf16.msra.mxu0 0
      %401 = vmatpush.bf16.msra.mxu0 0
      %402 = vmatpush.bf16.msra.mxu0 0
      %403 = vmatpush.bf16.msra.mxu0 0
      %404 = vmatpush.bf16.msra.mxu0 %v371
      %405 = vmatpush.bf16.msra.mxu0 %v349
      %406 = vmatpush.bf16.msra.mxu0 %v346
      %407 = vmatmul.bf16.gmra.mxu0 %v361
      %v408 = vpop.f32.mrf.mxu0
      %v409 = vadd.f32 %v317, %v408
      %v410 = vpop.f32.mrf.mxu0
      %411 = vdwg.mxu0
      %v412 = vpack.c.bf16 %v396, %v383
      %v413 = vpack.c.bf16 %v409, %v409
      %414 = vst [vmem:[%s285] sm:$0xff] %v412
      %415 = vst [vmem:[%s285 + $0x8] sm:$0xf] %v413
      %v416 = vlaneseq
      %v417 = vand.u32 %v416, 127
      %v418 = vadd.s32 %v417, 128
      %v419 = vadd.s32 %v417, 256
      %s420 = smul.u32 %s22, 384
      %v421 = vstv %s420
      %v422 = vadd.s32 %v417, %v421
      %v423 = vadd.s32 %v418, %v421
      %v424 = vadd.s32 %v419, %v421
      %vm425 = vcmp.lt.s32.totalorder %v422, 0
      %v426 = vsub.s32 0, %v422
      %v427 = vsel %vm425, %v426, %v422
      %v428 = vand.u32 %v427, 65535
      %v429 = vshrl.u32 %v427, 16
      %v431 = vmul.u32 %v428, 14564
      %v432 = vmul.u32 %v428, 58254
      %v433 = vmul.u32 %v429, 14564
      %v434 = vmul.u32 %v429, 58254
      %v435 = vshll.u32 %v432, 16
      %v436 = vshrl.u32 %v432, 16
      %v437 = vshll.u32 %v433, 16
      %v438 = vshrl.u32 %v433, 16
      %vm439 = vc.u32 %v431, %v435
      %v440 = vsel %vm439, 1, 0
      %v441 = vadd.s32 %v431, %v435
      %v442 = vadd.s32 %v434, %v440
      %vm443 = vc.u32 %v441, %v437
      %v444 = vsel %vm443, 1, 0
      %v445 = vadd.s32 %v441, %v437
      %v446 = vadd.s32 %v442, %v444
      %v447 = vadd.s32 %v446, %v436
      %v448 = vadd.s32 %v447, %v438
      %v449 = vshrl.u32 %v448, 4
      %v450 = vmul.u32 %v449, 18
      %v451 = vsub.s32 %v427, %v450
      %v452 = vsub.s32 0, %v451
      %v453 = vsel %vm425, %v452, %v451
      %vm454 = vcmp.lt.s32.totalorder %v423, 0
      %v455 = vsub.s32 0, %v423
      %v456 = vsel %vm454, %v455, %v423
      %v457 = vand.u32 %v456, 65535
      %v458 = vshrl.u32 %v456, 16
      %v460 = vmul.u32 %v457, 14564
      %v461 = vmul.u32 %v457, 58254
      %v462 = vmul.u32 %v458, 14564
      %v463 = vmul.u32 %v458, 58254
      %v464 = vshll.u32 %v461, 16
      %v465 = vshrl.u32 %v461, 16
      %v466 = vshll.u32 %v462, 16
      %v467 = vshrl.u32 %v462, 16
      %vm468 = vc.u32 %v460, %v464
      %v469 = vsel %vm468, 1, 0
      %v470 = vadd.s32 %v460, %v464
      %v471 = vadd.s32 %v463, %v469
      %vm472 = vc.u32 %v470, %v466
      %v473 = vsel %vm472, 1, 0
      %v474 = vadd.s32 %v470, %v466
      %v475 = vadd.s32 %v471, %v473
      %v476 = vadd.s32 %v475, %v465
      %v477 = vadd.s32 %v476, %v467
      %v478 = vshrl.u32 %v477, 4
      %v479 = vmul.u32 %v478, 18
      %v480 = vsub.s32 %v456, %v479
      %v481 = vsub.s32 0, %v480
      %v482 = vsel %vm454, %v481, %v480
      %vm483 = vcmp.lt.s32.totalorder %v424, 0
      %v484 = vsub.s32 0, %v424
      %v485 = vsel %vm483, %v484, %v424
      %v486 = vand.u32 %v485, 65535
      %v487 = vshrl.u32 %v485, 16
      %v489 = vmul.u32 %v486, 14564
      %v490 = vmul.u32 %v486, 58254
      %v491 = vmul.u32 %v487, 14564
      %v492 = vmul.u32 %v487, 58254
      %v493 = vshll.u32 %v490, 16
      %v494 = vshrl.u32 %v490, 16
      %v495 = vshll.u32 %v491, 16
      %v496 = vshrl.u32 %v491, 16
      %vm497 = vc.u32 %v489, %v493
      %v498 = vsel %vm497, 1, 0
      %v499 = vadd.s32 %v489, %v493
      %v500 = vadd.s32 %v492, %v498
      %vm501 = vc.u32 %v499, %v495
      %v502 = vsel %vm501, 1, 0
      %v503 = vadd.s32 %v499, %v495
      %v504 = vadd.s32 %v500, %v502
      %v505 = vadd.s32 %v504, %v494
      %v506 = vadd.s32 %v505, %v496
      %v507 = vshrl.u32 %v506, 4
      %v508 = vmul.u32 %v507, 18
      %v509 = vsub.s32 %v485, %v508
      %v510 = vsub.s32 0, %v509
      %v511 = vsel %vm483, %v510, %v509
      %vm512 = vcmp.ne.s32.totalorder %v453, 0
      %vm513 = vcmp.ne.s32.totalorder %v482, 0
      %vm514 = vcmp.ne.s32.totalorder %v511, 0
      %vm515 = vcmp.lt.s32.totalorder %v453, 0
      %vm516 = vcmp.lt.s32.totalorder %v482, 0
      %vm517 = vcmp.lt.s32.totalorder %v511, 0
      %vm518 = vmand %vm515, %vm512
      %vm519 = vmand %vm516, %vm513
      %vm520 = vmand %vm517, %vm514
      %v521 = vadd.s32 %v453, 18
      %v522 = vadd.s32 %v482, 18
      %v523 = vadd.s32 %v511, 18
      %v524 = vsel %vm518, %v521, %v453
      %v525 = vsel %vm519, %v522, %v482
      %v526 = vsel %vm520, %v523, %v511
      %vm527 = vcmp.lt.s32.totalorder %v524, 16
      %vm528 = vcmp.lt.s32.totalorder %v525, 16
      %vm529 = vcmp.lt.s32.totalorder %v526, 16
      %vm530 = vcmp.lt.s32.totalorder %v422, 288
      %vm531 = vcmp.lt.s32.totalorder %v423, 288
      %vm532 = vcmp.lt.s32.totalorder %v424, 288
      %vm533 = vmand %vm527, %vm530
      %vm534 = vmand %vm528, %vm531
      %vm535 = vmand %vm529, %vm532
      %v536 = vsel %vm533, 1, 0
      %v537 = vsel %vm534, 1, 0
      %v538 = vsel %vm535, 1, 0
      %v539 = vcvt.s32.f32 %v536
      %v540 = vcvt.s32.f32 %v537
      %v541 = vcvt.s32.f32 %v538
      %v542 = vmul.f32 %v383, %v539
      %v543 = vmul.f32 %v396, %v540
      %v544 = vmul.f32 %v409, %v541
      %v545 = vadd.f32 %v542, %v543
      %v546 = vadd.f32 %v545, %v544
      %547 = vadd.xlane.f32.xlu0 %v546
      %v548 = vpop.xlane.xlu0 %547
      %vm549 = vcmask 7168
      %550 = vst.msk [vmem:[%s293] sm:$0xff] %vm549, %v548
      %v551 = vmul.f32 %v542, %v383
      %v552 = vmul.f32 %v543, %v396
      %v553 = vmul.f32 %v544, %v409
      %v554 = vadd.f32 %v551, %v552
      %v555 = vadd.f32 %v554, %v553
      %556 = vadd.xlane.f32.xlu0 %v555
      %v557 = vpop.xlane.xlu0 %556
      %558 = vst.msk [vmem:[%s300] sm:$0xff] %vm549, %v557
      %s559 = smul.u32 3, %s22
      %p560 = scmp.lt.s32.totalorder %s21, 1
      %s561 = scalar_select %p560, %s21, 1
      %p562 = scmp.lt.s32.totalorder %s559, 2
      %s563 = scalar_select %p562, %s559, 2
      %s564 = smul.addr %s561, 3
      %s565 = sadd.s32 %s563, %s564
      %s566 = smul.addr %s565, 4
      %s567 = scalar_lea.vmem %s3, %s566
      %p568 = scmp.lt.s32.totalorder %s21, 1
      %s569 = scalar_select %p568, %s21, 1
      %p570 = scmp.lt.s32.totalorder %s22, 0
      %s571 = scalar_select %p570, %s22, 0
      %s572 = sadd.s32 %s571, %s569
      %s573 = smul.addr %s572, 8
      %s574 = scalar_lea.vmem %s4, %s573
      %p575 = scmp.lt.s32.totalorder %s21, 1
      %s576 = scalar_select %p575, %s21, 1
      %p577 = scmp.lt.s32.totalorder %s22, 0
      %s578 = scalar_select %p577, %s22, 0
      %s579 = sadd.s32 %s578, %s576
      %s580 = smul.addr %s579, 8
      %s581 = scalar_lea.vmem %s5, %s580
      // Predicated region
      $region33: #{conv2d_block_forward.2} parent=31 // pred_check
        %p582 = pneg %p119
      $region34: #{conv2d_block_forward.2} parent=31 // pred_check_branch
        %584 = sbr.rel (%p582) target = $region36
      $region35: #{conv2d_block_forward.2} parent=31 // pred_region
        %s585 = smul.u32 3, %s22
      $region36: #{conv2d_block_forward.2} parent=31 // pred_fallthru
        _
      // Predicated region
      $region37: #{conv2d_block_forward.2} parent=31 // pred_check
        %p586 = pneg %p147
      $region38: #{conv2d_block_forward.2} parent=31 // pred_check_branch
        %588 = sbr.rel (%p586) target = $region40
      $region39: #{conv2d_block_forward.2} parent=31 // pred_region
        _
      $region40: #{conv2d_block_forward.2} parent=31 // pred_fallthru
        _
      // Predicated region
      $region41: #{conv2d_block_forward.2} parent=31 // pred_check
        %p589 = pneg %p175
      $region42: #{conv2d_block_forward.2} parent=31 // pred_check_branch
        %591 = sbr.rel (%p589) target = $region44
      $region43: #{conv2d_block_forward.2} parent=31 // pred_region
        _
      $region44: #{conv2d_block_forward.2} parent=31 // pred_fallthru
        _
    $region32: #{conv2d_block_forward.2} parent=5 // pred_fallthru
      _
    %p592 = scmp.le.s32.totalorder 2, %s12
    // Predicated region
    $region45: #{conv2d_block_forward.2} parent=5 // pred_check
      %p593 = pneg %p592
    $region46: #{conv2d_block_forward.2} parent=5 // pred_check_branch
      %595 = sbr.rel (%p593) target = $region48
    $region47: #{conv2d_block_forward.2} parent=5 // pred_region
      %s596 = ssub.s32 %s12, 2
      // Predicated region
      $region49: #{conv2d_block_forward.2} parent=47 // pred_check
        %p597 = pneg %p125
      $region50: #{conv2d_block_forward.2} parent=47 // pred_check_branch
        %599 = sbr.rel (%p597) target = $region52
      $region51: #{conv2d_block_forward.2} parent=47 // pred_region
        %s600 = smul.u32 3, %s24
        %p601 = scmp.lt.s32.totalorder %s23, 1
        %s602 = scalar_select %p601, %s23, 1
        %p603 = scmp.lt.s32.totalorder %s600, 2
        %s604 = scalar_select %p603, %s600, 2
        %s605 = smul.addr %s602, 3
        %s606 = sadd.s32 %s604, %s605
        %s607 = smul.addr %s606, 4
        %s608 = scalar_lea.vmem %s3, %s607
      $region52: #{conv2d_block_forward.2} parent=47 // pred_fallthru
        _
      // Predicated region
      $region53: #{conv2d_block_forward.2} parent=47 // pred_check
        %p609 = pneg %p153
      $region54: #{conv2d_block_forward.2} parent=47 // pred_check_branch
        %611 = sbr.rel (%p609) target = $region56
      $region55: #{conv2d_block_forward.2} parent=47 // pred_region
        %p612 = scmp.lt.s32.totalorder %s23, 1
        %s613 = scalar_select %p612, %s23, 1
        %p614 = scmp.lt.s32.totalorder %s24, 0
        %s615 = scalar_select %p614, %s24, 0
        %s616 = sadd.s32 %s615, %s613
        %s617 = smul.addr %s616, 8
        %s618 = scalar_lea.vmem %s4, %s617
      $region56: #{conv2d_block_forward.2} parent=47 // pred_fallthru
        _
      // Predicated region
      $region57: #{conv2d_block_forward.2} parent=47 // pred_check
        %p619 = pneg %p181
      $region58: #{conv2d_block_forward.2} parent=47 // pred_check_branch
        %621 = sbr.rel (%p619) target = $region60
      $region59: #{conv2d_block_forward.2} parent=47 // pred_region
        %p622 = scmp.lt.s32.totalorder %s23, 1
        %s623 = scalar_select %p622, %s23, 1
        %p624 = scmp.lt.s32.totalorder %s24, 0
        %s625 = scalar_select %p624, %s24, 0
        %s626 = sadd.s32 %s625, %s623
        %s627 = smul.addr %s626, 8
        %s628 = scalar_lea.vmem %s5, %s627
      $region60: #{conv2d_block_forward.2} parent=47 // pred_fallthru
        _
    $region48: #{conv2d_block_forward.2} parent=5 // pred_fallthru
      _
  $region6: #{conv2d_block_forward.2} parent=0 // loop_footer
    %s16 = sadd.s32 1, %s12
  $region7: #{conv2d_block_forward.2} parent=0 // loop_footer_branch
    %11 = sbr.rel target = $region3
  $region8: #{conv2d_block_forward.2} parent=0 // loop_exit
    _

</llo_original>
